<compile_context>
chip_gen: v6e
topology: v6e:2x2x1
jax: 0.10.0
libtpu: 0.0.40
codegen_flags: <defaults>
</compile_context>

<pallas_src>
import jax
import jax.numpy as jnp
from jax.experimental import pallas as pl
from jax.experimental.pallas import tpu as pltpu


def _cdiv(a, b):
    return -(-a // b)


def _round_up(a, b):
    return _cdiv(a, b) * b


def affine_kernel(w_ref, b_ref, x_ref, o_ref):
    # w_ref: (2,) f32 in SMEM, b_ref: (1,) f32 in SMEM
    # x_ref: (2, R, 128) feature-major, sublane/lane-dense VMEM tile
    # o_ref: (R, 128) dense VMEM tile
    o_ref[...] = x_ref[0] * w_ref[0] + x_ref[1] * w_ref[1] + b_ref[0]


def circle_model_v1(x, params, *, max_block_rows=2048):
    """Forward pass of CircleModelV1.

    x: (N, 2) float32 (same layout as the PyTorch module's input).
    params: w1 (2,10), b1 (1,10), w2 (10,10), b2 (1,10), w3 (10,1), b3 (1,1),
            stored as (in_features, out_features) so y = x @ W + b.
    returns: (N, 1) float32
    """
    N, d_in = x.shape
    assert d_in == 2
    w1, b1 = params["w1"], params["b1"]
    w2, b2 = params["w2"], params["b2"]
    w3, b3 = params["w3"], params["b3"]

    # Fold the activation-free affine chain into one 2->1 affine map
    # (tiny matmuls, done once outside the kernel by XLA).
    w_eff = (w1 @ w2) @ w3                     # (2, 1)
    b_eff = (b1 @ w2 + b2) @ w3 + b3           # (1, 1)

    # ---- Static tiling decisions (N is a trace-time constant) ----------
    rows = max(1, _cdiv(N, 128))               # 128-lane rows needed
    num_blocks = _cdiv(rows, max_block_rows)
    if rows >= 16:
        # Keep >= 2 grid blocks so "parallel" can shard over v7x's two TCs.
        num_blocks = max(num_blocks, 2)
    R = _round_up(_cdiv(rows, num_blocks), 8)  # sublane-dense block rows
    n_rows = num_blocks * R
    n_pad = n_rows * 128

    # Single fused pad + transpose + reshape copy (fuses under jit): presents
    # x feature-major and fully dense as (2, n_rows, 128).
    xt = jnp.pad(x, ((0, n_pad - N), (0, 0))).T.reshape(2, n_rows, 128)

    out = pl.pallas_call(
        affine_kernel,
        out_shape=jax.ShapeDtypeStruct((n_rows, 128), jnp.float32),
        grid_spec=pltpu.PrefetchScalarGridSpec(
            num_scalar_prefetch=0,
            grid=(num_blocks,),
            in_specs=[
                pl.BlockSpec(memory_space=pltpu.MemorySpace.SMEM),   # w_eff (2,)
                pl.BlockSpec(memory_space=pltpu.MemorySpace.SMEM),   # b_eff (1,)
                pl.BlockSpec((2, R, 128), lambda i: (0, i, 0)),      # dense x tile
            ],
            out_specs=pl.BlockSpec((R, 128), lambda i: (i, 0)),      # dense out tile
        ),
        compiler_params=pltpu.CompilerParams(
            dimension_semantics=("parallel",),   # shard blocks across TCs on v7x
        ),
        cost_estimate=pl.CostEstimate(
            flops=4 * n_pad, transcendentals=0, bytes_accessed=12 * n_pad
        ),
    )(w_eff.reshape(2), b_eff.reshape(1), xt)

    # Free metadata reshape / slice back to the PyTorch (N, 1) contract.
    return out.reshape(n_pad, 1)[:N]


def init_params(key):
    """Deterministic init matching PyTorch nn.Linear's U(-1/sqrt(fan_in), .)."""
    def linear_init(k, fan_in, fan_out):
        kw, kb = jax.random.split(k)
        bound = 1.0 / jnp.sqrt(float(fan_in))
        # stored as (in, out) so the forward is x @ W + b
        w = jax.random.uniform(kw, (fan_in, fan_out), jnp.float32, -bound, bound)
        b = jax.random.uniform(kb, (1, fan_out), jnp.float32, -bound, bound)
        return w, b

    k1, k2, k3 = jax.random.split(key, 3)
    w1, b1 = linear_init(k1, 2, 10)
    w2, b2 = linear_init(k2, 10, 10)
    w3, b3 = linear_init(k3, 10, 1)
    return {"w1": w1, "b1": b1, "w2": w2, "b2": b2, "w3": w3, "b3": b3}


if __name__ == "__main__":
    key = jax.random.PRNGKey(0)
    kx, kp = jax.random.split(key)

    # Small demo shapes: N=200 exercises the pad-to-row-block path
    # (pads to 8 rows x 128 lanes = 1024 padded elements, grid of 1 block).
    N = 200
    x = jax.random.normal(kx, (N, 2), jnp.float32)
    params = init_params(kp)

    # Jit the whole forward so the wrapper pad+transpose+reshape fuse into a
    # single HBM copy around the pallas_call.
    fwd = jax.jit(circle_model_v1)
    out = jax.block_until_ready(fwd(x, params))

    # Pure-JAX reference: the original, unfolded three-layer forward
    # (same math as the PyTorch module).
    ref = x @ params["w1"] + params["b1"]
    ref = ref @ params["w2"] + params["b2"]
    ref = ref @ params["w3"] + params["b3"]
    assert out.shape == (N, 1)
    assert jnp.allclose(out, ref, atol=1e-5, rtol=1e-5)

    print("KERNEL_OK")
</pallas_src>

<mosaic_0001>
module attributes {stable_mosaic.version = 11 : i64} {
  func.func @affine_kernel(%arg0: i32, %arg1: memref<2xf32, #tpu.memory_space<smem>>, %arg2: memref<1xf32, #tpu.memory_space<smem>>, %arg3: memref<2x8x128xf32, #tpu.memory_space<vmem>>, %arg4: memref<8x128xf32, #tpu.memory_space<vmem>>) attributes {dimension_semantics = [#tpu.dimension_semantics<parallel>], iteration_bounds = array<i64: 1>, scalar_prefetch = 0 : i64, scratch_operands = 0 : i64, tpu.core_type = #tpu.core_type<tc>, window_params = [{transform_indices = @transform_0, window_bounds = array<i64: 2>}, {transform_indices = @transform_1, window_bounds = array<i64: 1>}, {transform_indices = @transform_2, window_bounds = array<i64: 2, 8, 128>}, {transform_indices = @transform_3, window_bounds = array<i64: 8, 128>}]} {
    %c0 = arith.constant 0 : index
    %c0_0 = arith.constant 0 : index
    %c0_1 = arith.constant 0 : index
    %0 = vector.load %arg3[%c0, %c0_0, %c0_1] : memref<2x8x128xf32, #tpu.memory_space<vmem>>, vector<1x8x128xf32>
    %1 = vector.shape_cast %0 : vector<1x8x128xf32> to vector<8x128xf32>
    %c0_2 = arith.constant 0 : index
    %2 = memref.load %arg1[%c0_2] : memref<2xf32, #tpu.memory_space<smem>>
    %3 = vector.broadcast %2 : f32 to vector<8x128xf32>
    %4 = arith.mulf %1, %3 : vector<8x128xf32>
    %c1 = arith.constant 1 : index
    %c0_3 = arith.constant 0 : index
    %c0_4 = arith.constant 0 : index
    %5 = vector.load %arg3[%c1, %c0_3, %c0_4] : memref<2x8x128xf32, #tpu.memory_space<vmem>>, vector<1x8x128xf32>
    %6 = vector.shape_cast %5 : vector<1x8x128xf32> to vector<8x128xf32>
    %c1_5 = arith.constant 1 : index
    %7 = memref.load %arg1[%c1_5] : memref<2xf32, #tpu.memory_space<smem>>
    %8 = vector.broadcast %7 : f32 to vector<8x128xf32>
    %9 = arith.mulf %6, %8 : vector<8x128xf32>
    %10 = arith.addf %4, %9 : vector<8x128xf32>
    %c0_6 = arith.constant 0 : index
    %11 = memref.load %arg2[%c0_6] : memref<1xf32, #tpu.memory_space<smem>>
    %12 = vector.broadcast %11 : f32 to vector<8x128xf32>
    %13 = arith.addf %10, %12 : vector<8x128xf32>
    %c0_7 = arith.constant 0 : index
    %c0_8 = arith.constant 0 : index
    %14 = vector.load %arg4[%c0_7, %c0_8] : memref<8x128xf32, #tpu.memory_space<vmem>>, vector<8x128xf32>
    tpu.vector_store %arg4[%c0_7, %c0_8], %13 {strides = array<i32>} : memref<8x128xf32, #tpu.memory_space<vmem>>, vector<8x128xf32>,
    return
  }
  func.func @transform_0(%arg0: i32) -> i32 {
    %c0_i32 = arith.constant 0 : i32
    %c0_i32_0 = arith.constant 0 : i32
    return %c0_i32 : i32
  }
  func.func @transform_1(%arg0: i32) -> i32 {
    %c0_i32 = arith.constant 0 : i32
    %c0_i32_0 = arith.constant 0 : i32
    return %c0_i32 : i32
  }
  func.func @transform_2(%arg0: i32) -> (i32, i32, i32) {
    %c0_i32 = arith.constant 0 : i32
    %c0_i32_0 = arith.constant 0 : i32
    %c0_i32_1 = arith.constant 0 : i32
    return %c0_i32, %arg0, %c0_i32_0 : i32, i32, i32
  }
  func.func @transform_3(%arg0: i32) -> (i32, i32) {
    %c0_i32 = arith.constant 0 : i32
    %c0_i32_0 = arith.constant 0 : i32
    return %arg0, %c0_i32 : i32, i32
  }
}

</mosaic_0001>

<llo_original>
// kernel: circle_model_v1.1
$region0: #{circle_model_v1.1}
  #allocation0 [shape = 'u32[]', space=smem, size = 0x4, offset = 0x4, fixed_abs, tag = 'smem constant byte address 0x4 - core index']
  #allocation1 [shape = 'u32[144,128]{1,0:T(1,128)}', space=vmem, size = 0x12000, scoped, tag = 'internal scratch']
  #allocation2 [shape = 'f32[1]{0:T(128)S(6)}', space=smem, size = 0x200, scoped, tag = 'scoped memory for circle_model_v1.1']
  %s0 = inlined_call_operand.vmem [shape: f32[2], index: 0, kind: input, shape index: {}]
  %s1 = inlined_call_operand.<no memory space> [shape: f32[1], index: 1, kind: input, shape index: {}]
  %s2 = inlined_call_operand.vmem [shape: f32[2,8,128], index: 2, kind: input, shape index: {}]
  %s3 = inlined_call_operand.vmem [shape: f32[8,128], index: 3, kind: output, shape index: {}]
  %s4 = sld [smem:[#allocation0]]
  $region26: #{circle_model_v1.1} parent=0
    _
  %s6 = ssub.s32 1, %s4
  %s7 = scalar_select 0, %s6, %s4
  %8 = sst [smem:[#allocation2]] %s1
  $region1: #{circle_model_v1.1} parent=0
    #allocation3 [shape = 'u8[512]{0}', space=smem, size = 0x200, scoped, tag = 'input window, operand 0, single buffered']
    #allocation4 [shape = 's32[1]{0}', space=sflag, size = 0x4, scoped, tag = 'scoped memory for circle_model_v1.1']
    %9 = vsyncpa [#allocation4], 0
    // Predicated region
    $region2: #{circle_model_v1.1} parent=1 // pred_check
      _
    $region3: #{circle_model_v1.1} parent=1 // pred_check_branch
      %11 = sbr.rel (0) target = $region5
    $region4: #{circle_model_v1.1} parent=1 // pred_region
      %s13 = ssub.s32 16, 16
      %14 = vsyncadd [#allocation4], %s13
      %s16 = sshll.u32 %s0, 4
      %s17 = int_to_ptr.vmem [resolvable:$true] %s16
      %19 = dma.vmem_to_smem %s17, 16, [#allocation3], [#allocation4]
    $region5: #{circle_model_v1.1} parent=1 // pred_fallthru
      _
    // Predicated region
    $region6: #{circle_model_v1.1} parent=1 // pred_check
      _
    $region7: #{circle_model_v1.1} parent=1 // pred_check_branch
      %21 = sbr.rel (0) target = $region9
    $region8: #{circle_model_v1.1} parent=1 // pred_region
      _
    $region9: #{circle_model_v1.1} parent=1 // pred_fallthru
      _
    // Predicated region
    $region10: #{circle_model_v1.1} parent=1 // pred_check
      _
    $region11: #{circle_model_v1.1} parent=1 // pred_check_branch
      %23 = sbr.rel (0) target = $region13
    $region12: #{circle_model_v1.1} parent=1 // pred_region
      _
    $region13: #{circle_model_v1.1} parent=1 // pred_fallthru
      _
    // Predicated region
    $region14: #{circle_model_v1.1} parent=1 // pred_check
      _
    $region15: #{circle_model_v1.1} parent=1 // pred_check_branch
      %25 = sbr.rel (0) target = $region17
    $region16: #{circle_model_v1.1} parent=1 // pred_region
      %26 = dma.done [#allocation4], 16
    $region17: #{circle_model_v1.1} parent=1 // pred_fallthru
      _
    %27 = sfence
    %v28 = vld [vmem:[%s2] sm:$0xff]
    %s29 = sld [smem:[#allocation3]]
    %v30 = vstv %s29
    %v31 = vmul.f32 %v28, %v30
    %s32 = scalar_lea.vmem %s2, 8
    %v33 = vld [vmem:[%s32] sm:$0xff]
    %s34 = sld [smem:[#allocation3 + $0x1]]
    %v35 = vstv %s34
    %v36 = vmul.f32 %v33, %v35
    %v37 = vadd.f32 %v31, %v36
    %s38 = sld [smem:[#allocation2]]
    %v39 = vstv %s38
    %v40 = vadd.f32 %v37, %v39
    %41 = vst [vmem:[%s3] sm:$0xff] %v40
    // Predicated region
    $region18: #{circle_model_v1.1} parent=1 // pred_check
      _
    $region19: #{circle_model_v1.1} parent=1 // pred_check_branch
      %43 = sbr.rel (0) target = $region21
    $region20: #{circle_model_v1.1} parent=1 // pred_region
      _
    $region21: #{circle_model_v1.1} parent=1 // pred_fallthru
      _
    // Predicated region
    $region22: #{circle_model_v1.1} parent=1 // pred_check
      _
    $region23: #{circle_model_v1.1} parent=1 // pred_check_branch
      %45 = sbr.rel (0) target = $region25
    $region24: #{circle_model_v1.1} parent=1 // pred_region
      _
    $region25: #{circle_model_v1.1} parent=1 // pred_fallthru
      _
    %46 = vsyncpa [#allocation4], 1

</llo_original>
